<compile_context>
chip_gen: v5e
topology: v5e:2x2
jax: 0.10.0
libtpu: 0.0.40
codegen_flags: <defaults>
</compile_context>

<pallas_src>
import functools

import jax
import jax.numpy as jnp
from jax.experimental import pallas as pl
from jax.experimental.pallas import tpu as pltpu

_MIB = 1024 * 1024


def _round_up(x, m):
    return ((x + m - 1) // m) * m


def _cdiv(a, b):
    return (a + b - 1) // b


@functools.lru_cache(maxsize=1)
def _tpu_generation_plan():
    """Generation-aware VMEM budget / tiling knobs (v7x vs v5e/v6e)."""
    try:
        cap = int(getattr(pltpu.get_tpu_info(), "vmem_capacity_bytes", 128 * _MIB))
    except Exception:
        cap = 128 * _MIB
    if cap <= 64 * _MIB:
        # v7x-class: 64 MiB VMEM, 2 TensorCores -> smaller budget, >=4 grid steps.
        return {"budget": 36 * _MIB, "vmem_limit": 48 * _MIB,
                "tm_max": 1024, "min_steps": 4}
    # v5e / v6e: 128 MiB VMEM, single TensorCore -> big tiles, no step heuristic.
    return {"budget": 64 * _MIB, "vmem_limit": 96 * _MIB,
            "tm_max": 2048, "min_steps": 1}


def _spec(shape, index_map, single_buffer=False):
    """BlockSpec helper; single_buffer=True requests Buffered(1) for
    grid-invariant operands (falls back to the default if unsupported)."""
    if single_buffer:
        try:
            return pl.BlockSpec(shape, index_map, pipeline_mode=pl.Buffered(1))
        except Exception:
            pass
    return pl.BlockSpec(shape, index_map)


def _plan_tiles(n_batch, m_sp, c_in, c_out, x_bytes, w_bytes):
    """Choose (TM spatial tile, TCo C_out tile) from the VMEM budget."""
    knobs = _tpu_generation_plan()
    budget, tm_max, min_steps = knobs["budget"], knobs["tm_max"], knobs["min_steps"]

    def w_block_bytes(tco):
        return _round_up(tco, 8) * _round_up(c_in, 128) * w_bytes

    # --- C_out tiling: keep the resident weight block <= ~8 MiB (no hard ceiling) ---
    tco = c_out
    if c_out % 128 == 0:
        while (tco > 128 and w_block_bytes(tco) > 8 * _MIB
               and c_out % (tco // 2) == 0 and (tco // 2) % 128 == 0):
            tco //= 2
    n_co = _cdiv(c_out, tco)

    # Weight/bias are grid-invariant when there is no C_out axis -> single buffer.
    # (Only bother when the block is large enough for the saved VMEM to matter.)
    single_w = (n_co == 1) and (w_block_bytes(tco) >= 512 * 1024)
    w_buf = 1 if single_w else 2
    fixed = w_buf * w_block_bytes(tco) + 2 * _round_up(tco, 8) * 128 * 4  # + bias

    def working_set(tm):
        x_blk = _round_up(c_in, 8) * _round_up(tm, 128) * x_bytes
        o_blk = _round_up(tco, 8) * _round_up(tm, 128) * x_bytes
        return fixed + 2 * (x_blk + o_blk)          # x/out double-buffered

    tm_cap = tm_max
    while tm_cap > 128 and working_set(tm_cap) > budget:
        tm_cap //= 2

    if m_sp <= tm_cap:
        tm = m_sp                                     # full dim -> always legal
    else:
        tm = 0
        for cand in range(tm_cap, 255, -128):         # prefer a >=256 divisor of m_sp
            if m_sp % cand == 0:
                tm = cand
                break
        if tm == 0:
            tm = tm_cap                               # ragged last block (masked)
    n_sp = _cdiv(m_sp, tm)

    # v7x: keep both TensorCores busy through the pipeline prologue/epilogue.
    while min_steps > 1 and n_batch * n_co * n_sp < min_steps and tm > 256:
        tm = max(256, _round_up(tm // 2, 128))
        n_sp = _cdiv(m_sp, tm)

    return tm, n_sp, tco, n_co, single_w, knobs["vmem_limit"]


def _skip_conv_bn_relu_kernel(x_ref, w_ref, b_ref, o_ref):
    # x_ref: (1, C_in, TM)  spatial columns of one batch element (lane dim = space)
    # w_ref: (TCo, C_in)    1x1 conv weight with BN scale folded in
    # b_ref: (TCo, 1)       folded BN bias = beta - mean * scale (f32)
    w = w_ref[...]
    x = x_ref[0].astype(w.dtype)        # bf16 MXU path for wide channels; no-op f32
    acc = jnp.dot(w, x, preferred_element_type=jnp.float32)     # (TCo, TM)
    o_ref[0] = jnp.maximum(acc + b_ref[...], 0.0).astype(o_ref.dtype)


@functools.partial(jax.jit, static_argnames=("stride", "eps"))
def skip_forward(x_nchw, weight, gamma, beta, running_mean, running_var,
                 stride=1, eps=1e-5):
    """Pallas implementation of Skip.forward (conv + BN + ReLU path).

    x_nchw : (N, C_in, H, W)          float32
    weight : (C_out, C_in, 1, 1)      PyTorch Conv2d weight layout (bias=False)
    gamma/beta/running_mean/running_var : (C_out,)
    """
    N, C_in, H, W = x_nchw.shape
    C_out = weight.shape[0]

    # ---- stride the spatial dims (view for stride==1), keep channels leading ----
    x_s = x_nchw if stride == 1 else x_nchw[:, :, ::stride, ::stride]
    Ho, Wo = x_s.shape[2], x_s.shape[3]
    M_sp = Ho * Wo
    x3 = x_s.reshape(N, C_in, M_sp)                   # (N, C_in, Ho*Wo)

    # ---- fold BN (inference) into weight/bias; bias is the only epilogue term ----
    scale = gamma / jnp.sqrt(running_var + eps)       # (C_out,)
    bias = (beta - running_mean * scale).reshape(C_out, 1).astype(jnp.float32)
    w_mat = weight.reshape(C_out, C_in) * scale[:, None]
    if x_nchw.dtype == jnp.float32 and min(C_in, C_out) >= 512:
        # Wide channels: bf16 MXU inputs (kernel casts x to match), f32 accumulate.
        w_mat = w_mat.astype(jnp.bfloat16)

    TM, n_sp, TCo, n_co, single_w, vmem_limit = _plan_tiles(
        N, M_sp, C_in, C_out, x_nchw.dtype.itemsize, w_mat.dtype.itemsize)

    out3 = pl.pallas_call(
        _skip_conv_bn_relu_kernel,
        out_shape=jax.ShapeDtypeStruct((N, C_out, M_sp), x_nchw.dtype),
        grid_spec=pltpu.PrefetchScalarGridSpec(
            num_scalar_prefetch=0,
            grid=(N, n_co, n_sp),
            in_specs=[
                pl.BlockSpec((1, C_in, TM), lambda n, k, j: (n, 0, j)),
                _spec((TCo, C_in), lambda n, k, j: (k, 0), single_buffer=single_w),
                _spec((TCo, 1), lambda n, k, j: (k, 0), single_buffer=single_w),
            ],
            out_specs=pl.BlockSpec((1, TCo, TM), lambda n, k, j: (n, k, j)),
        ),
        compiler_params=pltpu.CompilerParams(
            dimension_semantics=("parallel", "parallel", "parallel"),
            vmem_limit_bytes=int(vmem_limit),
        ),
    )(x3, w_mat, bias)

    return out3.reshape(N, C_out, Ho, Wo)             # already NCHW, no transpose


def skip_module_forward(x_nchw, params, C_in, C_out, stride):
    """Mirror of Skip.forward: identity unless (stride==2 or C_in!=C_out)."""
    if stride == 2 or C_in != C_out:
        return skip_forward(x_nchw, params["weight"], params["gamma"],
                            params["beta"], params["running_mean"],
                            params["running_var"], stride=stride)
    return x_nchw


def _reference(x, params, stride, eps=1e-5):
    C_out, C_in = params["weight"].shape[:2]
    w_mat = params["weight"].reshape(C_out, C_in)
    xs = x[:, :, ::stride, ::stride]
    ref = jnp.einsum("oc,nchw->nohw", w_mat, xs)
    scale = params["gamma"] / jnp.sqrt(params["running_var"] + eps)
    bias = params["beta"] - params["running_mean"] * scale
    return jnp.maximum(ref * scale[None, :, None, None] + bias[None, :, None, None], 0.0)


def _make_params(key, C_in, C_out):
    kw, kg, kb, km, kv = jax.random.split(key, 5)
    return {
        "weight": jax.random.normal(kw, (C_out, C_in, 1, 1), jnp.float32) * 0.1,
        "gamma": 1.0 + 0.1 * jax.random.normal(kg, (C_out,), jnp.float32),
        "beta": 0.1 * jax.random.normal(kb, (C_out,), jnp.float32),
        "running_mean": 0.1 * jax.random.normal(km, (C_out,), jnp.float32),
        "running_var": jnp.abs(1.0 + 0.1 * jax.random.normal(kv, (C_out,), jnp.float32)),
    }


if __name__ == "__main__":
    key = jax.random.PRNGKey(0)
    k0, k1, k2, k3, k4 = jax.random.split(key, 5)

    # 1) Skip(C_in=4, C_out=8, stride=2) -> conv+bn+relu path, tiny channels.
    N, C_in, H, W, C_out, stride = 2, 4, 16, 16, 8, 2
    x = jax.random.normal(k0, (N, C_in, H, W), dtype=jnp.float32)
    params = _make_params(k1, C_in, C_out)
    out = jax.block_until_ready(skip_module_forward(x, params, C_in, C_out, stride))
    assert out.shape == (N, C_out, H // stride, W // stride), out.shape
    assert jnp.allclose(out, _reference(x, params, stride), atol=1e-4, rtol=1e-4), \
        "mismatch vs reference (tiny-channel config)"

    # 2) identity path (stride=1, C_in==C_out) passes the input through untouched.
    x_id = jax.random.normal(k2, (N, C_in, H, W), dtype=jnp.float32)
    assert jnp.array_equal(skip_module_forward(x_id, params, C_in, C_in, 1), x_id)

    # 3) stride=1 channel-expansion path (zero-copy input view, odd spatial size).
    x3 = jax.random.normal(k3, (2, 16, 15, 15), jnp.float32)
    params3 = _make_params(k3, 16, 32)
    out3 = jax.block_until_ready(skip_module_forward(x3, params3, 16, 32, 1))
    assert jnp.allclose(out3, _reference(x3, params3, 1), atol=1e-4, rtol=1e-4), \
        "mismatch vs reference (stride-1 expansion config)"

    # 4) wider configuration exercising the 128-aligned, strided path.
    x4 = jax.random.normal(k4, (2, 256, 32, 32), jnp.float32)
    params4 = _make_params(k4, 256, 256)
    out4 = jax.block_until_ready(skip_module_forward(x4, params4, 256, 256, 2))
    assert jnp.allclose(out4, _reference(x4, params4, 2), atol=1e-3, rtol=1e-3), \
        "mismatch vs reference (wide config)"

    print("KERNEL_OK")
</pallas_src>

<mosaic_0001>
module attributes {stable_mosaic.version = 11 : i64} {
  func.func @_skip_conv_bn_relu_kernel(%arg0: i32, %arg1: i32, %arg2: i32, %arg3: memref<1x4x64xf32, #tpu.memory_space<vmem>>, %arg4: memref<8x4xf32, #tpu.memory_space<vmem>>, %arg5: memref<8x1xf32, #tpu.memory_space<vmem>>, %arg6: memref<1x8x64xf32, #tpu.memory_space<vmem>>) attributes {dimension_semantics = [#tpu.dimension_semantics<parallel>, #tpu.dimension_semantics<parallel>, #tpu.dimension_semantics<parallel>], iteration_bounds = array<i64: 2, 1, 1>, scalar_prefetch = 0 : i64, scratch_operands = 0 : i64, tpu.core_type = #tpu.core_type<tc>, window_params = [{transform_indices = @transform_0, window_bounds = array<i64: 1, 4, 64>}, {transform_indices = @transform_1, window_bounds = array<i64: 8, 4>}, {transform_indices = @transform_2, window_bounds = array<i64: 8, 1>}, {transform_indices = @transform_3, window_bounds = array<i64: 1, 8, 64>}]} {
    %c0 = arith.constant 0 : index
    %c0_0 = arith.constant 0 : index
    %0 = vector.load %arg4[%c0, %c0_0] : memref<8x4xf32, #tpu.memory_space<vmem>>, vector<8x4xf32>
    %c0_1 = arith.constant 0 : index
    %c0_2 = arith.constant 0 : index
    %c0_3 = arith.constant 0 : index
    %1 = vector.load %arg3[%c0_1, %c0_2, %c0_3] : memref<1x4x64xf32, #tpu.memory_space<vmem>>, vector<1x4x64xf32>
    %2 = vector.shape_cast %1 : vector<1x4x64xf32> to vector<4x64xf32>
    %cst = arith.constant dense<0.000000e+00> : vector<8x64xf32>
    %3 = tpu.matmul %0, %2, %cst {dimension_numbers = #tpu.dot_dimension_numbers<[1], [0], [0], [1], [0, 0, 1, 1], [], []>} : vector<8x4xf32>, vector<4x64xf32>, vector<8x64xf32> -> vector<8x64xf32>
    %c0_4 = arith.constant 0 : index
    %c0_5 = arith.constant 0 : index
    %4 = vector.load %arg5[%c0_4, %c0_5] : memref<8x1xf32, #tpu.memory_space<vmem>>, vector<8x1xf32>
    %5 = vector.broadcast %4 : vector<8x1xf32> to vector<8x64xf32>
    %6 = arith.addf %3, %5 : vector<8x64xf32>
    %cst_6 = arith.constant 0.000000e+00 : f32
    %7 = vector.broadcast %cst_6 : f32 to vector<8x64xf32>
    %8 = arith.maximumf %6, %7 : vector<8x64xf32>
    %c0_7 = arith.constant 0 : index
    %c0_8 = arith.constant 0 : index
    %c0_9 = arith.constant 0 : index
    %9 = vector.load %arg6[%c0_7, %c0_8, %c0_9] : memref<1x8x64xf32, #tpu.memory_space<vmem>>, vector<1x8x64xf32>
    %10 = vector.shape_cast %9 : vector<1x8x64xf32> to vector<8x64xf32>
    %11 = vector.shape_cast %8 : vector<8x64xf32> to vector<1x8x64xf32>
    tpu.vector_store %arg6[%c0_7, %c0_8, %c0_9], %11 {strides = array<i32>} : memref<1x8x64xf32, #tpu.memory_space<vmem>>, vector<1x8x64xf32>,
    return
  }
  func.func @transform_0(%arg0: i32, %arg1: i32, %arg2: i32) -> (i32, i32, i32) {
    %c0_i32 = arith.constant 0 : i32
    %c0_i32_0 = arith.constant 0 : i32
    return %arg0, %c0_i32, %arg2 : i32, i32, i32
  }
  func.func @transform_1(%arg0: i32, %arg1: i32, %arg2: i32) -> (i32, i32) {
    %c0_i32 = arith.constant 0 : i32
    %c0_i32_0 = arith.constant 0 : i32
    return %arg1, %c0_i32 : i32, i32
  }
  func.func @transform_2(%arg0: i32, %arg1: i32, %arg2: i32) -> (i32, i32) {
    %c0_i32 = arith.constant 0 : i32
    %c0_i32_0 = arith.constant 0 : i32
    return %arg1, %c0_i32 : i32, i32
  }
  func.func @transform_3(%arg0: i32, %arg1: i32, %arg2: i32) -> (i32, i32, i32) {
    %c0_i32 = arith.constant 0 : i32
    return %arg0, %arg1, %arg2 : i32, i32, i32
  }
}

</mosaic_0001>

<llo_original>
// kernel: skip_forward.1
$region0: #{skip_forward.1}
  #allocation0 [shape = 'u32[]', space=smem, size = 0x4, offset = 0x4, fixed_abs, tag = 'smem constant byte address 0x4 - core index']
  #allocation1 [shape = 'u32[72,128]{1,0:T(1,128)}', space=vmem, size = 0x9000, scoped, tag = 'internal scratch']
  %s0 = inlined_call_operand.vmem [shape: f32[2,4,64], index: 0, kind: input, shape index: {}]
  %s1 = inlined_call_operand.vmem [shape: f32[8,4], index: 1, kind: input, shape index: {}]
  %s2 = inlined_call_operand.vmem [shape: f32[8,1], index: 2, kind: input, shape index: {}]
  %s3 = inlined_call_operand.vmem [shape: f32[2,8,64], index: 3, kind: output, shape index: {}]
  %s4 = sld [smem:[#allocation0]]
  $region45: #{skip_forward.1} parent=0
    _
  %s6 = ssub.s32 1, %s4
  %s7 = scalar_select 0, %s6, %s4
  loop: start=0, step=1, limit=4
  $region2: #{skip_forward.1} parent=0 // loop_pre_header
    _
  $region3: #{skip_forward.1} parent=0 // loop_header
    %s9 = sphi 0, %s13
    %p10 = scmp.ge.s32.totalorder %s9, 4
    %s16 = sphi 0, %s35
    %s17 = sphi 0, %s31
    %s18 = sphi 0, %s27
    %s19 = sphi 0, %s16
    %s20 = sphi 0, %s17
    %s21 = sphi 0, %s18
    %s22 = sphi 0, %s19
    %s23 = sphi 0, %s20
    %s24 = sphi 0, %s21
    %s40 = sphi 0, %s42
    %s43 = sphi 0, %s40
    %s44 = sphi 0, %s43
    %s60 = sphi 0, %s44
    %s66 = sphi 0, %s68
    %s69 = sphi 0, %s66
    %s70 = sphi 0, %s69
    %s86 = sphi 0, %s70
    %s92 = sphi 0, %s94
    %s95 = sphi 0, %s92
    %s96 = sphi 0, %s95
    %s112 = sphi 0, %s96
    %s122 = sphi 0, %s124
    %s125 = sphi 0, %s122
    %s126 = sphi 0, %s125
    %s142 = sphi 0, %s126
  $region4: #{skip_forward.1} parent=0 // loop_header_branch
    %12 = sbr.rel (%p10) target = $region8
  $region5: #{skip_forward.1} parent=0 // loop_body
    %s14 = ssub.s32 %s9, 1
    %s15 = ssub.s32 %s9, 2
    %s25 = sadd.s32 1, %s18
    %p26 = scmp.ge.s32.totalorder %s25, 1
    %s27 = scalar_select %p26, 0, %s25
    %s28 = sadd.s32 1, %s17
    %s29 = scalar_select %p26, %s28, %s17
    %p30 = scmp.ge.s32.totalorder %s29, 1
    %s31 = scalar_select %p30, 0, %s29
    %s32 = sadd.s32 1, %s16
    %s33 = scalar_select %p30, %s32, %s16
    %p34 = scmp.ge.s32.totalorder %s33, 2
    %s35 = scalar_select %p34, 0, %s33
    %s36 = ssub.s32 %s16, %s35
    %s37 = ssub.s32 %s18, %s27
    %s38 = sor.u32 %s36, %s37
    %p39 = scmp.eq.s32.totalorder %s38, 0
    %s41 = sadd.s32 %s40, 1
    %s42 = scalar_select %p39, %s40, %s41
    %p45 = pneg %p39
    %p46 = scmp.eq.s32.totalorder %s9, 1
    %p47 = por %p45, %p46
    %p48 = scmp.ne.s32.totalorder %s40, %s43
    %p49 = scmp.eq.s32.totalorder %s9, 0
    %p50 = por %p48, %p49
    %p51 = scmp.ne.s32.totalorder %s40, %s43
    %p52 = scmp.eq.s32.totalorder %s14, 1
    %p53 = por %p51, %p52
    %p54 = scmp.ne.s32.totalorder %s43, %s44
    %p55 = scmp.eq.s32.totalorder %s14, 0
    %p56 = por %p54, %p55
    %p57 = scmp.ne.s32.totalorder %s43, %s44
    %p58 = scmp.eq.s32.totalorder %s15, 1
    %p59 = por %p57, %p58
    %p61 = scmp.ne.s32.totalorder %s44, %s60
    %p62 = scmp.eq.s32.totalorder %s15, 0
    %p63 = por %p61, %p62
    %s64 = ssub.s32 %s17, %s31
    %p65 = scmp.eq.s32.totalorder %s64, 0
    %s67 = sadd.s32 %s66, 1
    %s68 = scalar_select %p65, %s66, %s67
    %p71 = pneg %p65
    %p72 = scmp.eq.s32.totalorder %s9, 1
    %p73 = por %p71, %p72
    %p74 = scmp.ne.s32.totalorder %s66, %s69
    %p75 = scmp.eq.s32.totalorder %s9, 0
    %p76 = por %p74, %p75
    %p77 = scmp.ne.s32.totalorder %s66, %s69
    %p78 = scmp.eq.s32.totalorder %s14, 1
    %p79 = por %p77, %p78
    %p80 = scmp.ne.s32.totalorder %s69, %s70
    %p81 = scmp.eq.s32.totalorder %s14, 0
    %p82 = por %p80, %p81
    %p83 = scmp.ne.s32.totalorder %s69, %s70
    %p84 = scmp.eq.s32.totalorder %s15, 1
    %p85 = por %p83, %p84
    %p87 = scmp.ne.s32.totalorder %s70, %s86
    %p88 = scmp.eq.s32.totalorder %s15, 0
    %p89 = por %p87, %p88
    %s90 = ssub.s32 %s17, %s31
    %p91 = scmp.eq.s32.totalorder %s90, 0
    %s93 = sadd.s32 %s92, 1
    %s94 = scalar_select %p91, %s92, %s93
    %p97 = pneg %p91
    %p98 = scmp.eq.s32.totalorder %s9, 1
    %p99 = por %p97, %p98
    %p100 = scmp.ne.s32.totalorder %s92, %s95
    %p101 = scmp.eq.s32.totalorder %s9, 0
    %p102 = por %p100, %p101
    %p103 = scmp.ne.s32.totalorder %s92, %s95
    %p104 = scmp.eq.s32.totalorder %s14, 1
    %p105 = por %p103, %p104
    %p106 = scmp.ne.s32.totalorder %s95, %s96
    %p107 = scmp.eq.s32.totalorder %s14, 0
    %p108 = por %p106, %p107
    %p109 = scmp.ne.s32.totalorder %s95, %s96
    %p110 = scmp.eq.s32.totalorder %s15, 1
    %p111 = por %p109, %p110
    %p113 = scmp.ne.s32.totalorder %s96, %s112
    %p114 = scmp.eq.s32.totalorder %s15, 0
    %p115 = por %p113, %p114
    %s116 = ssub.s32 %s16, %s35
    %s117 = ssub.s32 %s17, %s31
    %s118 = sor.u32 %s116, %s117
    %s119 = ssub.s32 %s18, %s27
    %s120 = sor.u32 %s118, %s119
    %p121 = scmp.eq.s32.totalorder %s120, 0
    %s123 = sadd.s32 %s122, 1
    %s124 = scalar_select %p121, %s122, %s123
    %p127 = pneg %p121
    %p128 = scmp.eq.s32.totalorder %s9, 1
    %p129 = por %p127, %p128
    %p130 = scmp.ne.s32.totalorder %s122, %s125
    %p131 = scmp.eq.s32.totalorder %s9, 0
    %p132 = por %p130, %p131
    %p133 = scmp.ne.s32.totalorder %s122, %s125
    %p134 = scmp.eq.s32.totalorder %s14, 1
    %p135 = por %p133, %p134
    %p136 = scmp.ne.s32.totalorder %s125, %s126
    %p137 = scmp.eq.s32.totalorder %s14, 0
    %p138 = por %p136, %p137
    %p139 = scmp.ne.s32.totalorder %s125, %s126
    %p140 = scmp.eq.s32.totalorder %s15, 1
    %p141 = por %p139, %p140
    %p143 = scmp.ne.s32.totalorder %s126, %s142
    %p144 = scmp.eq.s32.totalorder %s15, 0
    %p145 = por %p143, %p144
    %p146 = scmp.le.s32.totalorder 1, %s9
    %p147 = scmp.lt.s32.totalorder %s9, 3
    %p148 = pnand %p146, %p147
    %p149 = pneg %p148
    // Predicated region
    $region9: #{skip_forward.1} parent=5 // pred_check
      _
    $region10: #{skip_forward.1} parent=5 // pred_check_branch
      %151 = sbr.rel (%p148) target = $region12
    $region11: #{skip_forward.1} parent=5 // pred_region
      %s152 = ssub.s32 %s9, 1
      // Predicated region
      $region13: #{skip_forward.1} parent=11 // pred_check
        %p153 = pneg %p82
      $region14: #{skip_forward.1} parent=11 // pred_check_branch
        %155 = sbr.rel (%p153) target = $region16
      $region15: #{skip_forward.1} parent=11 // pred_region
        %p156 = scmp.lt.s32.totalorder %s20, 0
        %s157 = scalar_select %p156, %s20, 0
        %s158 = smul.addr %s157, 8
        %s159 = scalar_lea.vmem %s1, %s158
      $region16: #{skip_forward.1} parent=11 // pred_fallthru
        _
      // Predicated region
      $region17: #{skip_forward.1} parent=11 // pred_check
        %p160 = pneg %p108
      $region18: #{skip_forward.1} parent=11 // pred_check_branch
        %162 = sbr.rel (%p160) target = $region20
      $region19: #{skip_forward.1} parent=11 // pred_region
        %p163 = scmp.lt.s32.totalorder %s20, 0
        %s164 = scalar_select %p163, %s20, 0
        %s165 = smul.addr %s164, 8
        %s166 = scalar_lea.vmem %s2, %s165
      $region20: #{skip_forward.1} parent=11 // pred_fallthru
        _
    $region12: #{skip_forward.1} parent=5 // pred_fallthru
      _
    %p167 = scmp.lt.s32.totalorder %s9, 2
    // Predicated region
    $region21: #{skip_forward.1} parent=5 // pred_check
      %p168 = pneg %p167
    $region22: #{skip_forward.1} parent=5 // pred_check_branch
      %170 = sbr.rel (%p168) target = $region24
    $region23: #{skip_forward.1} parent=5 // pred_region
      // Predicated region
      $region25: #{skip_forward.1} parent=23 // pred_check
        %p171 = pneg %p50
      $region26: #{skip_forward.1} parent=23 // pred_check_branch
        %173 = sbr.rel (%p171) target = $region28
      $region27: #{skip_forward.1} parent=23 // pred_region
        %p174 = scmp.lt.s32.totalorder %s16, 1
        %s175 = scalar_select %p174, %s16, 1
        %p176 = scmp.lt.s32.totalorder %s18, 0
        %s177 = scalar_select %p176, %s18, 0
        %s178 = sadd.s32 %s177, %s175
        %s179 = smul.addr %s178, 4
        %s180 = scalar_lea.vmem %s0, %s179
      $region28: #{skip_forward.1} parent=23 // pred_fallthru
        _
    $region24: #{skip_forward.1} parent=5 // pred_fallthru
      _
    %p181 = scmp.le.s32.totalorder 1, %s9
    %p182 = scmp.lt.s32.totalorder %s9, 3
    %p183 = pnand %p181, %p182
    %p184 = pneg %p183
    // Predicated region
    $region29: #{skip_forward.1} parent=5 // pred_check
      _
    $region30: #{skip_forward.1} parent=5 // pred_check_branch
      %186 = sbr.rel (%p183) target = $region32
    $region31: #{skip_forward.1} parent=5 // pred_region
      %s187 = ssub.s32 %s9, 1
      %p188 = scmp.lt.s32.totalorder %s19, 1
      %s189 = scalar_select %p188, %s19, 1
      %p190 = scmp.lt.s32.totalorder %s21, 0
      %s191 = scalar_select %p190, %s21, 0
      %s192 = sadd.s32 %s191, %s189
      %s193 = smul.addr %s192, 4
      %s194 = scalar_lea.vmem %s0, %s193
      %p195 = pneg %p56
      %p196 = pneg %p53
      %p197 = scmp.lt.s32.totalorder %s20, 0
      %s198 = scalar_select %p197, %s20, 0
      %s199 = smul.addr %s198, 8
      %s200 = scalar_lea.vmem %s1, %s199
      %p201 = pneg %p82
      %p202 = pneg %p79
      %p203 = scmp.lt.s32.totalorder %s20, 0
      %s204 = scalar_select %p203, %s20, 0
      %s205 = smul.addr %s204, 8
      %s206 = scalar_lea.vmem %s2, %s205
      %p207 = pneg %p108
      %p208 = pneg %p105
      %p209 = pneg %p138
      %p210 = pneg %p135
      %p211 = scmp.lt.s32.totalorder %s19, 1
      %s212 = scalar_select %p211, %s19, 1
      %p213 = scmp.lt.s32.totalorder %s20, 0
      %s214 = scalar_select %p213, %s20, 0
      %p215 = scmp.lt.s32.totalorder %s21, 0
      %s216 = scalar_select %p215, %s21, 0
      %s217 = sadd.s32 %s216, %s214
      %s218 = sadd.s32 %s217, %s212
      %s219 = smul.addr %s218, 8
      %s220 = scalar_lea.vmem %s3, %s219
      %p221 = scmp.lt.s32.totalorder %s19, 1
      %s222 = scalar_select %p221, %s19, 1
      %p223 = scmp.lt.s32.totalorder %s21, 0
      %s224 = scalar_select %p223, %s21, 0
      %s225 = sadd.s32 %s224, %s222
      %s226 = smul.addr %s225, 4
      %s227 = scalar_lea.vmem %s0, %s226
      %p228 = scmp.lt.s32.totalorder %s20, 0
      %s229 = scalar_select %p228, %s20, 0
      %s230 = smul.addr %s229, 8
      %s231 = scalar_lea.vmem %s1, %s230
      %p232 = scmp.lt.s32.totalorder %s20, 0
      %s233 = scalar_select %p232, %s20, 0
      %s234 = smul.addr %s233, 8
      %s235 = scalar_lea.vmem %s2, %s234
      %p236 = scmp.lt.s32.totalorder %s19, 1
      %s237 = scalar_select %p236, %s19, 1
      %p238 = scmp.lt.s32.totalorder %s20, 0
      %s239 = scalar_select %p238, %s20, 0
      %p240 = scmp.lt.s32.totalorder %s21, 0
      %s241 = scalar_select %p240, %s21, 0
      %s242 = sadd.s32 %s241, %s239
      %s243 = sadd.s32 %s242, %s237
      %s244 = smul.addr %s243, 8
      %s245 = scalar_lea.vmem %s3, %s244
      %v246 = vld [vmem:[%s231] sm:$0xff]
      %v247 = vld [vmem:[%s227] sm:$0xf]
      %v248 = vld [vmem:[%s235] sm:$0xff]
      %250 = vset.pattern.permute.xlu0 0
      %251 = vperm.xlu0 %250, %v248
      %v252 = vpop.permute.xlu0 %251
      %vm254 = vcmask 31744
      %v256 = vsel %vm254, %v246, 0
      %vm258 = vcmask 1043456
      %v260 = vsel %vm258, %v247, 0
      %262 = vmatpush.msra.mxu0 0.0
      %263 = vmatpush.msra.mxu0 0.0
      %264 = vmatpush.msra.mxu0 0.0
      %265 = vmatpush.msra.mxu0 0.0
      %266 = vmatpush.msra.mxu0 0.0
      %267 = vmatpush.msra.mxu0 0.0
      %268 = vmatpush.msra.mxu0 0.0
      %269 = vmatpush.msra.mxu0 0.0
      %270 = vmatpush.msra.mxu0 0.0
      %271 = vmatpush.msra.mxu0 0.0
      %272 = vmatpush.msra.mxu0 0.0
      %273 = vmatpush.msra.mxu0 0.0
      %274 = vmatpush.msra.mxu0 0.0
      %275 = vmatpush.msra.mxu0 0.0
      %276 = vmatpush.msra.mxu0 0.0
      %277 = vmatpush.msra.mxu0 %v260
      %278 = vmatmul.f32.gmra.mxu0 %v256
      %v279 = vpop.f32.mrf.mxu0
      %v280 = vadd.f32 %v252, %v279
      %281 = vdwg.mxu0
      %v282 = vmax.f32 %v280, 0.0
      %vm283 = vcmask 523264
      %284 = vst.msk [vmem:[%s245] sm:$0xff] %vm283, %v282
      %p285 = scmp.lt.s32.totalorder %s19, 1
      %s286 = scalar_select %p285, %s19, 1
      %p287 = scmp.lt.s32.totalorder %s20, 0
      %s288 = scalar_select %p287, %s20, 0
      %p289 = scmp.lt.s32.totalorder %s21, 0
      %s290 = scalar_select %p289, %s21, 0
      %s291 = sadd.s32 %s290, %s288
      %s292 = sadd.s32 %s291, %s286
      %s293 = smul.addr %s292, 8
      %s294 = scalar_lea.vmem %s3, %s293
      // Predicated region
      $region33: #{skip_forward.1} parent=31 // pred_check
        %p295 = pneg %p135
      $region34: #{skip_forward.1} parent=31 // pred_check_branch
        %297 = sbr.rel (%p295) target = $region36
      $region35: #{skip_forward.1} parent=31 // pred_region
        _
      $region36: #{skip_forward.1} parent=31 // pred_fallthru
        _
    $region32: #{skip_forward.1} parent=5 // pred_fallthru
      _
    %p298 = scmp.le.s32.totalorder 2, %s9
    // Predicated region
    $region37: #{skip_forward.1} parent=5 // pred_check
      %p299 = pneg %p298
    $region38: #{skip_forward.1} parent=5 // pred_check_branch
      %301 = sbr.rel (%p299) target = $region40
    $region39: #{skip_forward.1} parent=5 // pred_region
      %s302 = ssub.s32 %s9, 2
      // Predicated region
      $region41: #{skip_forward.1} parent=39 // pred_check
        %p303 = pneg %p141
      $region42: #{skip_forward.1} parent=39 // pred_check_branch
        %305 = sbr.rel (%p303) target = $region44
      $region43: #{skip_forward.1} parent=39 // pred_region
        %p306 = scmp.lt.s32.totalorder %s22, 1
        %s307 = scalar_select %p306, %s22, 1
        %p308 = scmp.lt.s32.totalorder %s23, 0
        %s309 = scalar_select %p308, %s23, 0
        %p310 = scmp.lt.s32.totalorder %s24, 0
        %s311 = scalar_select %p310, %s24, 0
        %s312 = sadd.s32 %s311, %s309
        %s313 = sadd.s32 %s312, %s307
        %s314 = smul.addr %s313, 8
        %s315 = scalar_lea.vmem %s3, %s314
      $region44: #{skip_forward.1} parent=39 // pred_fallthru
        _
    $region40: #{skip_forward.1} parent=5 // pred_fallthru
      _
  $region6: #{skip_forward.1} parent=0 // loop_footer
    %s13 = sadd.s32 1, %s9
  $region7: #{skip_forward.1} parent=0 // loop_footer_branch
    %8 = sbr.rel target = $region3
  $region8: #{skip_forward.1} parent=0 // loop_exit
    _

</llo_original>
